<compile_context>
chip_gen: v6e
topology: v6e:2x2x1
jax: 0.10.0
libtpu: 0.0.40
codegen_flags: <defaults>
</compile_context>

<pallas_src>
import functools
import math

import jax
import jax.numpy as jnp
from jax.experimental import pallas as pl
from jax.experimental.pallas import tpu as pltpu


def _round_up(x, m):
    return ((x + m - 1) // m) * m


_INV_SQRT2 = 1.0 / math.sqrt(2.0)
_SQRT_2_OVER_PI = math.sqrt(2.0 / math.pi)


def _erf(z):
    # Abramowitz & Stegun 7.1.26 rational approximation, |err| <= 1.5e-7.
    # Built only from mul/add/exp/select so it lowers on every TPU generation.
    # The divide is kept exact (not pl.reciprocal approx): this is the
    # accuracy-faithful path; use activation="gelu_tanh" for the fast path.
    a1, a2, a3, a4, a5 = (0.254829592, -0.284496736, 1.421413741,
                          -1.453152027, 1.061405429)
    p = 0.3275911
    az = jnp.abs(z)
    t = 1.0 / (1.0 + p * az)
    poly = ((((a5 * t + a4) * t + a3) * t + a2) * t + a1) * t
    e = 1.0 - poly * jnp.exp(-az * az)
    return jnp.where(z >= 0.0, e, -e)


def _gelu_erf(x):
    # erf-form GELU (matches the torch.erf-based gelu in BERT's ACT2FN).
    return 0.5 * x * (1.0 + _erf(x * _INV_SQRT2))


def _gelu_tanh(x):
    # tanh-form GELU: the transcendental lands on the (otherwise idle) EUP
    # slot, cutting the VALU-bound erf-polynomial epilogue ~3-4x on v6e/v7x.
    inner = _SQRT_2_OVER_PI * (x + 0.044715 * (x * x * x))
    return 0.5 * x * (1.0 + jnp.tanh(inner))


def _head_transform_kernel(x_ref, w_ref, b_ref, gamma_ref, beta_ref, o_ref,
                           *, eps, inv_h, activation):
    # x_ref:   (tm, H) tile of input rows (native dtype)
    # w_ref:   (H, H)  dense weight already in (in, out) layout, grid-invariant
    # b_ref / gamma_ref / beta_ref: (1, H)
    # Plain (1,0) contraction -> MXU, f32 accumulation; no in-kernel transpose.
    y = jnp.dot(x_ref[...], w_ref[...], preferred_element_type=jnp.float32)
    y = y + b_ref[...].astype(jnp.float32)

    if activation == "gelu_tanh":
        y = _gelu_tanh(y)
    else:
        y = _gelu_erf(y)

    # LayerNorm over the hidden axis -- single pass (sum + sum-of-squares).
    # If the XLU ever becomes the binding slot, these two cross-lane reduces
    # could be offloaded to the idle MXU as y @ ones((H, 1)).
    s = jnp.sum(y, axis=-1, keepdims=True)
    s2 = jnp.sum(y * y, axis=-1, keepdims=True)
    mean = s * inv_h
    var = jnp.maximum(s2 * inv_h - mean * mean, 0.0)
    inv = jax.lax.rsqrt(var + eps)
    out = ((y - mean) * inv * gamma_ref[...].astype(jnp.float32)
           + beta_ref[...].astype(jnp.float32))
    o_ref[...] = out.astype(o_ref.dtype)


def bert_prediction_head_transform(hidden_states, w, b, gamma, beta, *,
                                   eps=1e-12, tm=512, activation="gelu",
                                   mxu_dtype=None):
    """hidden_states: (..., H); w: (H, H) in PyTorch (out, in) layout."""
    orig_shape = hidden_states.shape
    H = orig_shape[-1]
    x2d = hidden_states.reshape(-1, H)
    M = x2d.shape[0]
    out_dtype = hidden_states.dtype

    # One-time weight transpose to (in, out): constant-folded / amortized by
    # XLA for static weights, and removes any chance of a per-step vxpose.
    w_t = jnp.transpose(w)

    if mxu_dtype is not None:           # e.g. jnp.bfloat16 on v5e
        x2d = x2d.astype(mxu_dtype)
        w_t = w_t.astype(mxu_dtype)

    b2d = b.reshape(1, H)
    g2d = gamma.reshape(1, H)
    be2d = beta.reshape(1, H)

    # Row tile: multiple of 8 sublanes, shrunk for tiny inputs.  No padding:
    # the grid uses cdiv and Pallas masks the ragged last block (LayerNorm is
    # row-local, out-of-bounds output rows are dropped).
    tm = max(8, (min(tm, _round_up(M, 8)) // 8) * 8)

    # Generation-aware VMEM budget (v5e/v6e: 128 MiB, v7x: 64 MiB per TC).
    try:
        vmem_cap = int(pltpu.get_tpu_info().vmem_capacity_bytes)
    except Exception:
        vmem_cap = 64 * 1024 * 1024
    budget = int(0.85 * vmem_cap)

    in_item = x2d.dtype.itemsize
    w_item = w_t.dtype.itemsize
    out_item = jnp.dtype(out_dtype).itemsize

    def _vmem_est(t):
        return (2 * t * H * in_item          # double-buffered input tiles
                + 2 * t * H * out_item       # double-buffered output tiles
                + 2 * H * H * w_item         # weight (conservative: 2 bufs)
                + 8 * H * 4                  # bias / gamma / beta
                + 3 * t * H * 4)             # f32 temporaries in the epilogue

    while tm > 128 and _vmem_est(tm) > budget:
        tm = max(128, ((tm // 2) // 8) * 8)

    vmem_limit = int(min(budget, max(32 * 1024 * 1024, 2 * _vmem_est(tm))))

    kernel = functools.partial(_head_transform_kernel, eps=eps, inv_h=1.0 / H,
                               activation=activation)

    n_transc = 2 if activation == "gelu" else 1     # exp+div vs tanh per elem
    cost = pl.CostEstimate(
        flops=2 * M * H * H,
        transcendentals=n_transc * M * H + M,
        bytes_accessed=(M * H * in_item + M * H * out_item
                        + H * H * w_item + 3 * H * 4))

    grid = (pl.cdiv(M, tm),)

    def _build(param_pipeline_mode):
        def _const_spec(shape):
            if param_pipeline_mode is None:
                return pl.BlockSpec(shape, lambda i: (0, 0))
            return pl.BlockSpec(shape, lambda i: (0, 0),
                                pipeline_mode=param_pipeline_mode)

        return pl.pallas_call(
            kernel,
            out_shape=jax.ShapeDtypeStruct((M, H), out_dtype),
            grid_spec=pltpu.PrefetchScalarGridSpec(
                num_scalar_prefetch=0,
                grid=grid,
                in_specs=[
                    pl.BlockSpec((tm, H), lambda i: (i, 0)),   # activation rows
                    _const_spec((H, H)),                       # weight (in,out)
                    _const_spec((1, H)),                       # bias
                    _const_spec((1, H)),                       # gamma
                    _const_spec((1, H)),                       # beta
                ],
                out_specs=pl.BlockSpec((tm, H), lambda i: (i, 0)),
            ),
            compiler_params=pltpu.CompilerParams(
                dimension_semantics=("parallel",),
                vmem_limit_bytes=vmem_limit),
            cost_estimate=cost,
        )

    # Constant operands want a single pipeline buffer (index_map never
    # changes).  Fall back to default double buffering if this Pallas build
    # rejects Buffered(1).
    try:
        pm = pl.Buffered(1)
    except Exception:
        pm = None
    try:
        out2d = jax.block_until_ready(_build(pm)(x2d, w_t, b2d, g2d, be2d))
    except Exception:
        if pm is None:
            raise
        out2d = _build(None)(x2d, w_t, b2d, g2d, be2d)

    return out2d.reshape(orig_shape)


def _reference(hidden_states, w, b, gamma, beta, eps=1e-12, approximate=False):
    x = hidden_states.astype(jnp.float32)
    y = jnp.einsum("...h,oh->...o", x, w.astype(jnp.float32)) + b.astype(jnp.float32)
    y = jax.nn.gelu(y, approximate=approximate)
    mean = jnp.mean(y, axis=-1, keepdims=True)
    var = jnp.mean((y - mean) ** 2, axis=-1, keepdims=True)
    out = (y - mean) * jax.lax.rsqrt(var + eps) * gamma + beta
    return out.astype(hidden_states.dtype)


if __name__ == "__main__":
    B, S, H = 2, 8, 32          # batch, seq, hidden_size
    eps = 1e-12                 # config.layer_norm_eps

    key = jax.random.PRNGKey(0)
    k1, k2, k3, k4, k5 = jax.random.split(key, 5)

    hidden_states = jax.random.normal(k1, (B, S, H), dtype=jnp.float32)

    # Deterministic synthetic parameters (nn.Linear(H, H), nn.LayerNorm(H)).
    w = jax.random.normal(k2, (H, H), dtype=jnp.float32) * 0.02   # (out, in)
    b = jax.random.normal(k3, (H,), dtype=jnp.float32) * 0.02
    gamma = 1.0 + 0.1 * jax.random.normal(k4, (H,), dtype=jnp.float32)
    beta = 0.1 * jax.random.normal(k5, (H,), dtype=jnp.float32)

    # Default (exact erf-GELU) path.
    out = jax.block_until_ready(
        bert_prediction_head_transform(hidden_states, w, b, gamma, beta, eps=eps))
    ref = _reference(hidden_states, w, b, gamma, beta, eps=eps)
    assert out.shape == (B, S, H)
    assert jnp.allclose(out, ref, atol=1e-4, rtol=1e-4), "mismatch (erf gelu)"

    # Ragged row count (M = 15): exercises the cdiv grid / masked edge block
    # (no pad / slice HBM round trips anymore).
    hs2 = jax.random.normal(k1, (3, 5, H), dtype=jnp.float32)
    out2 = jax.block_until_ready(
        bert_prediction_head_transform(hs2, w, b, gamma, beta, eps=eps))
    ref2 = _reference(hs2, w, b, gamma, beta, eps=eps)
    assert out2.shape == (3, 5, H)
    assert jnp.allclose(out2, ref2, atol=1e-4, rtol=1e-4), "mismatch (ragged rows)"

    # Fast tanh-form GELU path (v6e/v7x VALU relief), checked against the
    # matching approximate reference.
    out3 = jax.block_until_ready(
        bert_prediction_head_transform(hidden_states, w, b, gamma, beta,
                                       eps=eps, activation="gelu_tanh"))
    ref3 = _reference(hidden_states, w, b, gamma, beta, eps=eps, approximate=True)
    assert jnp.allclose(out3, ref3, atol=1e-3, rtol=1e-3), "mismatch (tanh gelu)"

    print("KERNEL_OK")
</pallas_src>

<mosaic_0001>
module attributes {stable_mosaic.version = 11 : i64} {
  func.func @_head_transform_kernel(%arg0: i32, %arg1: memref<16x32xf32, #tpu.memory_space<vmem>>, %arg2: memref<32x32xf32, #tpu.memory_space<vmem>>, %arg3: memref<1x32xf32, #tpu.memory_space<vmem>>, %arg4: memref<1x32xf32, #tpu.memory_space<vmem>>, %arg5: memref<1x32xf32, #tpu.memory_space<vmem>>, %arg6: memref<16x32xf32, #tpu.memory_space<vmem>>) attributes {dimension_semantics = [#tpu.dimension_semantics<parallel>], iteration_bounds = array<i64: 1>, scalar_prefetch = 0 : i64, scratch_operands = 0 : i64, tpu.core_type = #tpu.core_type<tc>, window_params = [{transform_indices = @transform_0, window_bounds = array<i64: 16, 32>}, {pipeline_mode = #tpu.pipeline_mode<synchronous>, transform_indices = @transform_1, window_bounds = array<i64: 32, 32>}, {pipeline_mode = #tpu.pipeline_mode<synchronous>, transform_indices = @transform_2, window_bounds = array<i64: 1, 32>}, {pipeline_mode = #tpu.pipeline_mode<synchronous>, transform_indices = @transform_3, window_bounds = array<i64: 1, 32>}, {pipeline_mode = #tpu.pipeline_mode<synchronous>, transform_indices = @transform_4, window_bounds = array<i64: 1, 32>}, {transform_indices = @transform_5, window_bounds = array<i64: 16, 32>}]} {
    %c0 = arith.constant 0 : index
    %c0_0 = arith.constant 0 : index
    %0 = vector.load %arg1[%c0, %c0_0] : memref<16x32xf32, #tpu.memory_space<vmem>>, vector<16x32xf32>
    %c0_1 = arith.constant 0 : index
    %c0_2 = arith.constant 0 : index
    %1 = vector.load %arg2[%c0_1, %c0_2] : memref<32x32xf32, #tpu.memory_space<vmem>>, vector<32x32xf32>
    %cst = arith.constant dense<0.000000e+00> : vector<16x32xf32>
    %2 = tpu.matmul %0, %1, %cst {dimension_numbers = #tpu.dot_dimension_numbers<[1], [0], [0], [1], [0, 0, 1, 1], [], []>} : vector<16x32xf32>, vector<32x32xf32>, vector<16x32xf32> -> vector<16x32xf32>
    %c0_3 = arith.constant 0 : index
    %c0_4 = arith.constant 0 : index
    %3 = vector.load %arg3[%c0_3, %c0_4] : memref<1x32xf32, #tpu.memory_space<vmem>>, vector<1x32xf32>
    %4 = vector.broadcast %3 : vector<1x32xf32> to vector<16x32xf32>
    %5 = arith.addf %2, %4 : vector<16x32xf32>
    %cst_5 = arith.constant 5.000000e-01 : f32
    %6 = vector.broadcast %cst_5 : f32 to vector<16x32xf32>
    %7 = arith.mulf %6, %5 : vector<16x32xf32>
    %cst_6 = arith.constant 0.707106769 : f32
    %8 = vector.broadcast %cst_6 : f32 to vector<16x32xf32>
    %9 = arith.mulf %5, %8 : vector<16x32xf32>
    %10 = math.absf %9 : vector<16x32xf32>
    %cst_7 = arith.constant 0.327591091 : f32
    %11 = vector.broadcast %cst_7 : f32 to vector<16x32xf32>
    %12 = arith.mulf %11, %10 : vector<16x32xf32>
    %cst_8 = arith.constant 1.000000e+00 : f32
    %13 = vector.broadcast %cst_8 : f32 to vector<16x32xf32>
    %14 = arith.addf %13, %12 : vector<16x32xf32>
    %cst_9 = arith.constant 1.000000e+00 : f32
    %15 = vector.broadcast %cst_9 : f32 to vector<16x32xf32>
    %16 = arith.divf %15, %14 : vector<16x32xf32>
    %cst_10 = arith.constant 1.06140542 : f32
    %17 = vector.broadcast %cst_10 : f32 to vector<16x32xf32>
    %18 = arith.mulf %17, %16 : vector<16x32xf32>
    %cst_11 = arith.constant -1.45315206 : f32
    %19 = vector.broadcast %cst_11 : f32 to vector<16x32xf32>
    %20 = arith.addf %18, %19 : vector<16x32xf32>
    %21 = arith.mulf %20, %16 : vector<16x32xf32>
    %cst_12 = arith.constant 1.42141378 : f32
    %22 = vector.broadcast %cst_12 : f32 to vector<16x32xf32>
    %23 = arith.addf %21, %22 : vector<16x32xf32>
    %24 = arith.mulf %23, %16 : vector<16x32xf32>
    %cst_13 = arith.constant -0.284496725 : f32
    %25 = vector.broadcast %cst_13 : f32 to vector<16x32xf32>
    %26 = arith.addf %24, %25 : vector<16x32xf32>
    %27 = arith.mulf %26, %16 : vector<16x32xf32>
    %cst_14 = arith.constant 0.254829586 : f32
    %28 = vector.broadcast %cst_14 : f32 to vector<16x32xf32>
    %29 = arith.addf %27, %28 : vector<16x32xf32>
    %30 = arith.mulf %29, %16 : vector<16x32xf32>
    %cst_15 = arith.constant 0.000000e+00 : f32
    %31 = vector.broadcast %cst_15 : f32 to vector<16x32xf32>
    %32 = arith.subf %31, %10 : vector<16x32xf32>
    %33 = arith.mulf %32, %10 : vector<16x32xf32>
    %34 = math.exp %33 : vector<16x32xf32>
    %35 = arith.mulf %30, %34 : vector<16x32xf32>
    %cst_16 = arith.constant 1.000000e+00 : f32
    %36 = vector.broadcast %cst_16 : f32 to vector<16x32xf32>
    %37 = arith.subf %36, %35 : vector<16x32xf32>
    %cst_17 = arith.constant 0.000000e+00 : f32
    %38 = vector.broadcast %cst_17 : f32 to vector<16x32xf32>
    %39 = arith.cmpf oge, %9, %38 : vector<16x32xf32>
    %cst_18 = arith.constant 0.000000e+00 : f32
    %40 = vector.broadcast %cst_18 : f32 to vector<16x32xf32>
    %41 = arith.subf %40, %37 : vector<16x32xf32>
    %42 = arith.select %39, %37, %41 : vector<16x32xi1>, vector<16x32xf32>
    %cst_19 = arith.constant 1.000000e+00 : f32
    %43 = vector.broadcast %cst_19 : f32 to vector<16x32xf32>
    %44 = arith.addf %43, %42 : vector<16x32xf32>
    %45 = arith.mulf %7, %44 : vector<16x32xf32>
    %cst_20 = arith.constant dense<0.000000e+00> : vector<16xf32>
    %46 = vector.multi_reduction <add>, %45, %cst_20 [1] : vector<16x32xf32> to vector<16xf32>
    %47 = vector.shape_cast %46 : vector<16xf32> to vector<16x1xf32>
    %48 = arith.mulf %45, %45 : vector<16x32xf32>
    %cst_21 = arith.constant dense<0.000000e+00> : vector<16xf32>
    %49 = vector.multi_reduction <add>, %48, %cst_21 [1] : vector<16x32xf32> to vector<16xf32>
    %50 = vector.shape_cast %49 : vector<16xf32> to vector<16x1xf32>
    %cst_22 = arith.constant 3.125000e-02 : f32
    %51 = vector.broadcast %cst_22 : f32 to vector<16x1xf32>
    %52 = arith.mulf %47, %51 : vector<16x1xf32>
    %cst_23 = arith.constant 3.125000e-02 : f32
    %53 = vector.broadcast %cst_23 : f32 to vector<16x1xf32>
    %54 = arith.mulf %50, %53 : vector<16x1xf32>
    %55 = arith.mulf %52, %52 : vector<16x1xf32>
    %56 = arith.subf %54, %55 : vector<16x1xf32>
    %cst_24 = arith.constant 0.000000e+00 : f32
    %57 = vector.broadcast %cst_24 : f32 to vector<16x1xf32>
    %58 = arith.maximumf %56, %57 : vector<16x1xf32>
    %cst_25 = arith.constant 9.99999996E-13 : f32
    %59 = vector.broadcast %cst_25 : f32 to vector<16x1xf32>
    %60 = arith.addf %58, %59 : vector<16x1xf32>
    %61 = math.rsqrt %60 : vector<16x1xf32>
    %62 = vector.broadcast %52 : vector<16x1xf32> to vector<16x32xf32>
    %63 = arith.subf %45, %62 : vector<16x32xf32>
    %64 = vector.broadcast %61 : vector<16x1xf32> to vector<16x32xf32>
    %65 = arith.mulf %63, %64 : vector<16x32xf32>
    %c0_26 = arith.constant 0 : index
    %c0_27 = arith.constant 0 : index
    %66 = vector.load %arg4[%c0_26, %c0_27] : memref<1x32xf32, #tpu.memory_space<vmem>>, vector<1x32xf32>
    %67 = vector.broadcast %66 : vector<1x32xf32> to vector<16x32xf32>
    %68 = arith.mulf %65, %67 : vector<16x32xf32>
    %c0_28 = arith.constant 0 : index
    %c0_29 = arith.constant 0 : index
    %69 = vector.load %arg5[%c0_28, %c0_29] : memref<1x32xf32, #tpu.memory_space<vmem>>, vector<1x32xf32>
    %70 = vector.broadcast %69 : vector<1x32xf32> to vector<16x32xf32>
    %71 = arith.addf %68, %70 : vector<16x32xf32>
    %c0_30 = arith.constant 0 : index
    %c0_31 = arith.constant 0 : index
    %72 = vector.load %arg6[%c0_30, %c0_31] : memref<16x32xf32, #tpu.memory_space<vmem>>, vector<16x32xf32>
    tpu.vector_store %arg6[%c0_30, %c0_31], %71 {strides = array<i32>} : memref<16x32xf32, #tpu.memory_space<vmem>>, vector<16x32xf32>,
    return
  }
  func.func @transform_0(%arg0: i32) -> (i32, i32) {
    %c0_i32 = arith.constant 0 : i32
    %c0_i32_0 = arith.constant 0 : i32
    return %arg0, %c0_i32 : i32, i32
  }
  func.func @transform_1(%arg0: i32) -> (i32, i32) {
    %c0_i32 = arith.constant 0 : i32
    %c0_i32_0 = arith.constant 0 : i32
    %c0_i32_1 = arith.constant 0 : i32
    return %c0_i32, %c0_i32_0 : i32, i32
  }
  func.func @transform_2(%arg0: i32) -> (i32, i32) {
    %c0_i32 = arith.constant 0 : i32
    %c0_i32_0 = arith.constant 0 : i32
    %c0_i32_1 = arith.constant 0 : i32
    return %c0_i32, %c0_i32_0 : i32, i32
  }
  func.func @transform_3(%arg0: i32) -> (i32, i32) {
    %c0_i32 = arith.constant 0 : i32
    %c0_i32_0 = arith.constant 0 : i32
    %c0_i32_1 = arith.constant 0 : i32
    return %c0_i32, %c0_i32_0 : i32, i32
  }
  func.func @transform_4(%arg0: i32) -> (i32, i32) {
    %c0_i32 = arith.constant 0 : i32
    %c0_i32_0 = arith.constant 0 : i32
    %c0_i32_1 = arith.constant 0 : i32
    return %c0_i32, %c0_i32_0 : i32, i32
  }
  func.func @transform_5(%arg0: i32) -> (i32, i32) {
    %c0_i32 = arith.constant 0 : i32
    %c0_i32_0 = arith.constant 0 : i32
    return %arg0, %c0_i32 : i32, i32
  }
}

module attributes {stable_mosaic.version = 11 : i64} {
  func.func @_head_transform_kernel(%arg0: i32, %arg1: memref<16x32xf32, #tpu.memory_space<vmem>>, %arg2: memref<32x32xf32, #tpu.memory_space<vmem>>, %arg3: memref<1x32xf32, #tpu.memory_space<vmem>>, %arg4: memref<1x32xf32, #tpu.memory_space<vmem>>, %arg5: memref<1x32xf32, #tpu.memory_space<vmem>>, %arg6: memref<16x32xf32, #tpu.memory_space<vmem>>) attributes {dimension_semantics = [#tpu.dimension_semantics<parallel>], iteration_bounds = array<i64: 1>, scalar_prefetch = 0 : i64, scratch_operands = 0 : i64, tpu.core_type = #tpu.core_type<tc>, window_params = [{transform_indices = @transform_0, window_bounds = array<i64: 16, 32>}, {pipeline_mode = #tpu.pipeline_mode<synchronous>, transform_indices = @transform_1, window_bounds = array<i64: 32, 32>}, {pipeline_mode = #tpu.pipeline_mode<synchronous>, transform_indices = @transform_2, window_bounds = array<i64: 1, 32>}, {pipeline_mode = #tpu.pipeline_mode<synchronous>, transform_indices = @transform_3, window_bounds = array<i64: 1, 32>}, {pipeline_mode = #tpu.pipeline_mode<synchronous>, transform_indices = @transform_4, window_bounds = array<i64: 1, 32>}, {transform_indices = @transform_5, window_bounds = array<i64: 16, 32>}]} {
    %c0 = arith.constant 0 : index
    %c0_0 = arith.constant 0 : index
    %0 = vector.load %arg1[%c0, %c0_0] : memref<16x32xf32, #tpu.memory_space<vmem>>, vector<16x32xf32>
    %c0_1 = arith.constant 0 : index
    %c0_2 = arith.constant 0 : index
    %1 = vector.load %arg2[%c0_1, %c0_2] : memref<32x32xf32, #tpu.memory_space<vmem>>, vector<32x32xf32>
    %cst = arith.constant dense<0.000000e+00> : vector<16x32xf32>
    %2 = tpu.matmul %0, %1, %cst {dimension_numbers = #tpu.dot_dimension_numbers<[1], [0], [0], [1], [0, 0, 1, 1], [], []>} : vector<16x32xf32>, vector<32x32xf32>, vector<16x32xf32> -> vector<16x32xf32>
    %c0_3 = arith.constant 0 : index
    %c0_4 = arith.constant 0 : index
    %3 = vector.load %arg3[%c0_3, %c0_4] : memref<1x32xf32, #tpu.memory_space<vmem>>, vector<1x32xf32>
    %4 = vector.broadcast %3 : vector<1x32xf32> to vector<16x32xf32>
    %5 = arith.addf %2, %4 : vector<16x32xf32>
    %cst_5 = arith.constant 5.000000e-01 : f32
    %6 = vector.broadcast %cst_5 : f32 to vector<16x32xf32>
    %7 = arith.mulf %6, %5 : vector<16x32xf32>
    %cst_6 = arith.constant 0.707106769 : f32
    %8 = vector.broadcast %cst_6 : f32 to vector<16x32xf32>
    %9 = arith.mulf %5, %8 : vector<16x32xf32>
    %10 = math.absf %9 : vector<16x32xf32>
    %cst_7 = arith.constant 0.327591091 : f32
    %11 = vector.broadcast %cst_7 : f32 to vector<16x32xf32>
    %12 = arith.mulf %11, %10 : vector<16x32xf32>
    %cst_8 = arith.constant 1.000000e+00 : f32
    %13 = vector.broadcast %cst_8 : f32 to vector<16x32xf32>
    %14 = arith.addf %13, %12 : vector<16x32xf32>
    %cst_9 = arith.constant 1.000000e+00 : f32
    %15 = vector.broadcast %cst_9 : f32 to vector<16x32xf32>
    %16 = arith.divf %15, %14 : vector<16x32xf32>
    %cst_10 = arith.constant 1.06140542 : f32
    %17 = vector.broadcast %cst_10 : f32 to vector<16x32xf32>
    %18 = arith.mulf %17, %16 : vector<16x32xf32>
    %cst_11 = arith.constant -1.45315206 : f32
    %19 = vector.broadcast %cst_11 : f32 to vector<16x32xf32>
    %20 = arith.addf %18, %19 : vector<16x32xf32>
    %21 = arith.mulf %20, %16 : vector<16x32xf32>
    %cst_12 = arith.constant 1.42141378 : f32
    %22 = vector.broadcast %cst_12 : f32 to vector<16x32xf32>
    %23 = arith.addf %21, %22 : vector<16x32xf32>
    %24 = arith.mulf %23, %16 : vector<16x32xf32>
    %cst_13 = arith.constant -0.284496725 : f32
    %25 = vector.broadcast %cst_13 : f32 to vector<16x32xf32>
    %26 = arith.addf %24, %25 : vector<16x32xf32>
    %27 = arith.mulf %26, %16 : vector<16x32xf32>
    %cst_14 = arith.constant 0.254829586 : f32
    %28 = vector.broadcast %cst_14 : f32 to vector<16x32xf32>
    %29 = arith.addf %27, %28 : vector<16x32xf32>
    %30 = arith.mulf %29, %16 : vector<16x32xf32>
    %cst_15 = arith.constant 0.000000e+00 : f32
    %31 = vector.broadcast %cst_15 : f32 to vector<16x32xf32>
    %32 = arith.subf %31, %10 : vector<16x32xf32>
    %33 = arith.mulf %32, %10 : vector<16x32xf32>
    %34 = math.exp %33 : vector<16x32xf32>
    %35 = arith.mulf %30, %34 : vector<16x32xf32>
    %cst_16 = arith.constant 1.000000e+00 : f32
    %36 = vector.broadcast %cst_16 : f32 to vector<16x32xf32>
    %37 = arith.subf %36, %35 : vector<16x32xf32>
    %cst_17 = arith.constant 0.000000e+00 : f32
    %38 = vector.broadcast %cst_17 : f32 to vector<16x32xf32>
    %39 = arith.cmpf oge, %9, %38 : vector<16x32xf32>
    %cst_18 = arith.constant 0.000000e+00 : f32
    %40 = vector.broadcast %cst_18 : f32 to vector<16x32xf32>
    %41 = arith.subf %40, %37 : vector<16x32xf32>
    %42 = arith.select %39, %37, %41 : vector<16x32xi1>, vector<16x32xf32>
    %cst_19 = arith.constant 1.000000e+00 : f32
    %43 = vector.broadcast %cst_19 : f32 to vector<16x32xf32>
    %44 = arith.addf %43, %42 : vector<16x32xf32>
    %45 = arith.mulf %7, %44 : vector<16x32xf32>
    %cst_20 = arith.constant dense<0.000000e+00> : vector<16xf32>
    %46 = vector.multi_reduction <add>, %45, %cst_20 [1] : vector<16x32xf32> to vector<16xf32>
    %47 = vector.shape_cast %46 : vector<16xf32> to vector<16x1xf32>
    %48 = arith.mulf %45, %45 : vector<16x32xf32>
    %cst_21 = arith.constant dense<0.000000e+00> : vector<16xf32>
    %49 = vector.multi_reduction <add>, %48, %cst_21 [1] : vector<16x32xf32> to vector<16xf32>
    %50 = vector.shape_cast %49 : vector<16xf32> to vector<16x1xf32>
    %cst_22 = arith.constant 3.125000e-02 : f32
    %51 = vector.broadcast %cst_22 : f32 to vector<16x1xf32>
    %52 = arith.mulf %47, %51 : vector<16x1xf32>
    %cst_23 = arith.constant 3.125000e-02 : f32
    %53 = vector.broadcast %cst_23 : f32 to vector<16x1xf32>
    %54 = arith.mulf %50, %53 : vector<16x1xf32>
    %55 = arith.mulf %52, %52 : vector<16x1xf32>
    %56 = arith.subf %54, %55 : vector<16x1xf32>
    %cst_24 = arith.constant 0.000000e+00 : f32
    %57 = vector.broadcast %cst_24 : f32 to vector<16x1xf32>
    %58 = arith.maximumf %56, %57 : vector<16x1xf32>
    %cst_25 = arith.constant 9.99999996E-13 : f32
    %59 = vector.broadcast %cst_25 : f32 to vector<16x1xf32>
    %60 = arith.addf %58, %59 : vector<16x1xf32>
    %61 = math.rsqrt %60 : vector<16x1xf32>
    %62 = vector.broadcast %52 : vector<16x1xf32> to vector<16x32xf32>
    %63 = arith.subf %45, %62 : vector<16x32xf32>
    %64 = vector.broadcast %61 : vector<16x1xf32> to vector<16x32xf32>
    %65 = arith.mulf %63, %64 : vector<16x32xf32>
    %c0_26 = arith.constant 0 : index
    %c0_27 = arith.constant 0 : index
    %66 = vector.load %arg4[%c0_26, %c0_27] : memref<1x32xf32, #tpu.memory_space<vmem>>, vector<1x32xf32>
    %67 = vector.broadcast %66 : vector<1x32xf32> to vector<16x32xf32>
    %68 = arith.mulf %65, %67 : vector<16x32xf32>
    %c0_28 = arith.constant 0 : index
    %c0_29 = arith.constant 0 : index
    %69 = vector.load %arg5[%c0_28, %c0_29] : memref<1x32xf32, #tpu.memory_space<vmem>>, vector<1x32xf32>
    %70 = vector.broadcast %69 : vector<1x32xf32> to vector<16x32xf32>
    %71 = arith.addf %68, %70 : vector<16x32xf32>
    %c0_30 = arith.constant 0 : index
    %c0_31 = arith.constant 0 : index
    %72 = vector.load %arg6[%c0_30, %c0_31] : memref<16x32xf32, #tpu.memory_space<vmem>>, vector<16x32xf32>
    tpu.vector_store %arg6[%c0_30, %c0_31], %71 {strides = array<i32>} : memref<16x32xf32, #tpu.memory_space<vmem>>, vector<16x32xf32>,
    return
  }
  func.func @transform_0(%arg0: i32) -> (i32, i32) {
    %c0_i32 = arith.constant 0 : i32
    %c0_i32_0 = arith.constant 0 : i32
    return %arg0, %c0_i32 : i32, i32
  }
  func.func @transform_1(%arg0: i32) -> (i32, i32) {
    %c0_i32 = arith.constant 0 : i32
    %c0_i32_0 = arith.constant 0 : i32
    %c0_i32_1 = arith.constant 0 : i32
    return %c0_i32, %c0_i32_0 : i32, i32
  }
  func.func @transform_2(%arg0: i32) -> (i32, i32) {
    %c0_i32 = arith.constant 0 : i32
    %c0_i32_0 = arith.constant 0 : i32
    %c0_i32_1 = arith.constant 0 : i32
    return %c0_i32, %c0_i32_0 : i32, i32
  }
  func.func @transform_3(%arg0: i32) -> (i32, i32) {
    %c0_i32 = arith.constant 0 : i32
    %c0_i32_0 = arith.constant 0 : i32
    %c0_i32_1 = arith.constant 0 : i32
    return %c0_i32, %c0_i32_0 : i32, i32
  }
  func.func @transform_4(%arg0: i32) -> (i32, i32) {
    %c0_i32 = arith.constant 0 : i32
    %c0_i32_0 = arith.constant 0 : i32
    %c0_i32_1 = arith.constant 0 : i32
    return %c0_i32, %c0_i32_0 : i32, i32
  }
  func.func @transform_5(%arg0: i32) -> (i32, i32) {
    %c0_i32 = arith.constant 0 : i32
    %c0_i32_0 = arith.constant 0 : i32
    return %arg0, %c0_i32 : i32, i32
  }
}

</mosaic_0001>

<llo_original>
// kernel: tpu_custom_call.1
$region0: #{tpu_custom_call.1}
  #allocation0 [shape = 'u32[]', space=smem, size = 0x4, offset = 0x4, fixed_abs, tag = 'smem constant byte address 0x4 - core index']
  #allocation1 [shape = 'u32[144,128]{1,0:T(1,128)}', space=vmem, size = 0x12000, scoped, tag = 'internal scratch']
  %s0 = inlined_call_operand.hbm [shape: f32[16,32], index: 0, kind: input, shape index: {}]
  %s1 = inlined_call_operand.hbm [shape: f32[32,32], index: 1, kind: input, shape index: {}]
  %s2 = inlined_call_operand.vmem [shape: f32[1,32], index: 2, kind: input, shape index: {}]
  %s3 = inlined_call_operand.vmem [shape: f32[1,32], index: 3, kind: input, shape index: {}]
  %s4 = inlined_call_operand.vmem [shape: f32[1,32], index: 4, kind: input, shape index: {}]
  %s5 = inlined_call_operand.hbm [shape: f32[16,32], index: 5, kind: output, shape index: {}]
  %s6 = sld [smem:[#allocation0]]
  $region38: #{tpu_custom_call.1} parent=0
    _
  %s8 = ssub.s32 1, %s6
  %s9 = scalar_select 0, %s8, %s6
  $region1: #{tpu_custom_call.1} parent=0
    #allocation2 [shape = 'u8[8192]{0}', space=vmem, size = 0x2000, scoped, tag = 'input window, operand 0, single buffered']
    #allocation3 [shape = 's32[1]{0}', space=sflag, size = 0x4, scoped, tag = 'scoped memory for tpu_custom_call.1']
    #allocation4 [shape = 's32[1]{0}', space=sflag, size = 0x4, scoped, tag = 'scoped memory for tpu_custom_call.1']
    #allocation5 [shape = 'u8[16384]{0}', space=vmem, size = 0x4000, scoped, tag = 'input window, operand 1, single buffered']
    #allocation6 [shape = 's32[1]{0}', space=sflag, size = 0x4, scoped, tag = 'scoped memory for tpu_custom_call.1']
    #allocation7 [shape = 'u8[8192]{0}', space=vmem, size = 0x2000, scoped, tag = 'output window, operand 0, single buffered']
    %10 = vsyncpa [#allocation3], 0
    %11 = vsyncpa [#allocation6], 0
    %12 = vsyncpa [#allocation4], 0
    // Predicated region
    $region2: #{tpu_custom_call.1} parent=1 // pred_check
      _
    $region3: #{tpu_custom_call.1} parent=1 // pred_check_branch
      %14 = sbr.rel (0) target = $region5
    $region4: #{tpu_custom_call.1} parent=1 // pred_region
      %s16 = ssub.s32 256, 256
      %17 = vsyncadd [#allocation3], %s16
      %s18 = sshll.u32 [#allocation2], 4
      %s19 = int_to_ptr.vmem [resolvable:$true] %s18
      %24 = dma.hbm_to_vmem [thread:$0]  %s0, 256, %s19, [#allocation3], 128, 128, 8
    $region5: #{tpu_custom_call.1} parent=1 // pred_fallthru
      _
    // Predicated region
    $region6: #{tpu_custom_call.1} parent=1 // pred_check
      _
    $region7: #{tpu_custom_call.1} parent=1 // pred_check_branch
      %26 = sbr.rel (0) target = $region9
    $region8: #{tpu_custom_call.1} parent=1 // pred_region
      %s28 = ssub.s32 512, 512
      %29 = vsyncadd [#allocation6], %s28
      %s30 = sshll.u32 [#allocation5], 4
      %s31 = int_to_ptr.vmem [resolvable:$true] %s30
      %36 = dma.hbm_to_vmem [thread:$0]  %s1, 512, %s31, [#allocation6], 128, 128, 8
    $region9: #{tpu_custom_call.1} parent=1 // pred_fallthru
      _
    // Predicated region
    $region10: #{tpu_custom_call.1} parent=1 // pred_check
      _
    $region11: #{tpu_custom_call.1} parent=1 // pred_check_branch
      %38 = sbr.rel (0) target = $region13
    $region12: #{tpu_custom_call.1} parent=1 // pred_region
      _
    $region13: #{tpu_custom_call.1} parent=1 // pred_fallthru
      _
    // Predicated region
    $region14: #{tpu_custom_call.1} parent=1 // pred_check
      _
    $region15: #{tpu_custom_call.1} parent=1 // pred_check_branch
      %40 = sbr.rel (0) target = $region17
    $region16: #{tpu_custom_call.1} parent=1 // pred_region
      _
    $region17: #{tpu_custom_call.1} parent=1 // pred_fallthru
      _
    // Predicated region
    $region18: #{tpu_custom_call.1} parent=1 // pred_check
      _
    $region19: #{tpu_custom_call.1} parent=1 // pred_check_branch
      %42 = sbr.rel (0) target = $region21
    $region20: #{tpu_custom_call.1} parent=1 // pred_region
      _
    $region21: #{tpu_custom_call.1} parent=1 // pred_fallthru
      _
    // Predicated region
    $region22: #{tpu_custom_call.1} parent=1 // pred_check
      _
    $region23: #{tpu_custom_call.1} parent=1 // pred_check_branch
      %44 = sbr.rel (0) target = $region25
    $region24: #{tpu_custom_call.1} parent=1 // pred_region
      %45 = dma.done [#allocation3], 256
    $region25: #{tpu_custom_call.1} parent=1 // pred_fallthru
      _
    // Predicated region
    $region26: #{tpu_custom_call.1} parent=1 // pred_check
      _
    $region27: #{tpu_custom_call.1} parent=1 // pred_check_branch
      %47 = sbr.rel (0) target = $region29
    $region28: #{tpu_custom_call.1} parent=1 // pred_region
      %48 = dma.done [#allocation6], 512
    $region29: #{tpu_custom_call.1} parent=1 // pred_fallthru
      _
    %v49 = vld [vmem:[#allocation2] sm:$0xff]
    %v50 = vld [vmem:[#allocation2 + $0x8] sm:$0xff]
    %v51 = vld [vmem:[#allocation5] sm:$0xff]
    %v52 = vld [vmem:[#allocation5 + $0x8] sm:$0xff]
    %v53 = vld [vmem:[#allocation5 + $0x10] sm:$0xff]
    %v54 = vld [vmem:[#allocation5 + $0x18] sm:$0xff]
    %v55 = vld [vmem:[%s2] sm:$0x1]
    %v57 = vlaneseq
    %v58 = vshrl.u32 %v57, 7
    %v59 = vsub.s32 0, %v58
    %v60 = vrot.slane %v55, %v59
    %vm62 = vcmask 261120
    %v64 = vsel %vm62, %v49, 0
    %v67 = vsel %vm62, %v50, 0
    %69 = vmatprep.subr.mxu0 0.0
    %70 = vmatpush1.msra.mxu0 0.0
    %71 = vmatprep.subr.mxu0 0.0
    %72 = vmatpush1.msra.mxu0 0.0
    %73 = vmatprep.subr.mxu0 0.0
    %74 = vmatpush1.msra.mxu0 0.0
    %75 = vmatprep.subr.mxu0 0.0
    %76 = vmatpush1.msra.mxu0 0.0
    %77 = vmatprep.subr.mxu0 0.0
    %78 = vmatpush1.msra.mxu0 0.0
    %79 = vmatprep.subr.mxu0 0.0
    %80 = vmatpush1.msra.mxu0 0.0
    %81 = vmatprep.subr.mxu0 0.0
    %82 = vmatpush1.msra.mxu0 0.0
    %83 = vmatprep.subr.mxu0 0.0
    %84 = vmatpush1.msra.mxu0 0.0
    %85 = vmatprep.subr.mxu0 0.0
    %86 = vmatpush1.msra.mxu0 0.0
    %87 = vmatprep.subr.mxu0 0.0
    %88 = vmatpush1.msra.mxu0 0.0
    %89 = vmatprep.subr.mxu0 0.0
    %90 = vmatpush1.msra.mxu0 0.0
    %91 = vmatprep.subr.mxu0 0.0
    %92 = vmatpush1.msra.mxu0 0.0
    %93 = vmatprep.subr.mxu0 0.0
    %94 = vmatpush1.msra.mxu0 %v54
    %95 = vmatprep.subr.mxu0 0.0
    %96 = vmatpush1.msra.mxu0 %v53
    %97 = vmatprep.subr.mxu0 0.0
    %98 = vmatpush1.msra.mxu0 %v52
    %99 = vmatprep.subr.mxu0 0.0
    %100 = vmatpush1.msra.mxu0 %v51
    %101 = vmatprep.subr.mxu0 0.0
    %102 = vmatpush2.msra.mxu0 0.0
    %103 = vmatprep.subr.mxu0 0.0
    %104 = vmatpush2.msra.mxu0 0.0
    %105 = vmatprep.subr.mxu0 0.0
    %106 = vmatpush2.msra.mxu0 0.0
    %107 = vmatprep.subr.mxu0 0.0
    %108 = vmatpush2.msra.mxu0 0.0
    %109 = vmatprep.subr.mxu0 0.0
    %110 = vmatpush2.msra.mxu0 0.0
    %111 = vmatprep.subr.mxu0 0.0
    %112 = vmatpush2.msra.mxu0 0.0
    %113 = vmatprep.subr.mxu0 0.0
    %114 = vmatpush2.msra.mxu0 0.0
    %115 = vmatprep.subr.mxu0 0.0
    %116 = vmatpush2.msra.mxu0 0.0
    %117 = vmatprep.subr.mxu0 0.0
    %118 = vmatpush2.msra.mxu0 0.0
    %119 = vmatprep.subr.mxu0 0.0
    %120 = vmatpush2.msra.mxu0 0.0
    %121 = vmatprep.subr.mxu0 0.0
    %122 = vmatpush2.msra.mxu0 0.0
    %123 = vmatprep.subr.mxu0 0.0
    %124 = vmatpush2.msra.mxu0 0.0
    %125 = vmatprep.subr.mxu0 0.0
    %126 = vmatpush2.msra.mxu0 0.0
    %127 = vmatprep.subr.mxu0 0.0
    %128 = vmatpush2.msra.mxu0 0.0
    %129 = vmatprep.subr.mxu0 0.0
    %130 = vmatpush2.msra.mxu0 0.0
    %131 = vmatprep.subr.mxu0 0.0
    %132 = vmatpush2.msra.mxu0 0.0
    %133 = vmatprep.mubr.f32.mxu0 0.0
    %134 = vmatmul.mubr.f32.gmra.mxu0 %v64
    %v135 = vpop.f32.mrf.mxu0
    %v136 = vadd.f32 %v60, %v135
    %v137 = vpop.f32.mrf.mxu0
    %138 = vmatprep.mubr.f32.mxu0 0.0
    %139 = vmatmul.mubr.f32.gmra.mxu0 %v67
    %v140 = vpop.f32.mrf.mxu0
    %v141 = vadd.f32 %v60, %v140
    %v142 = vpop.f32.mrf.mxu0
    %143 = vdwg.mxu0
    %v144 = vmul.f32 %v136, 0.5
    %v145 = vmul.f32 %v141, 0.5
    %v146 = vmul.f32 %v136, 0.70710677
    %v147 = vmul.f32 %v141, 0.70710677
    %v148 = vand.u32 2147483647, %v146
    %v149 = vand.u32 2147483647, %v147
    %v150 = vmul.f32 %v148, 0.3275911
    %v151 = vmul.f32 %v149, 0.3275911
    %v152 = vadd.f32 %v150, 1.0
    %v153 = vadd.f32 %v151, 1.0
    %v154 = vrcp.pop %v152
    %v155 = vmul.f32 1.0, %v154
    %v156 = vrcp.pop %v153
    %v157 = vmul.f32 1.0, %v156
    %v158 = vmul.f32 %v155, 1.0614054
    %v159 = vmul.f32 %v157, 1.0614054
    %v160 = vadd.f32 %v158, -1.4531521
    %v161 = vadd.f32 %v159, -1.4531521
    %v162 = vmul.f32 %v160, %v155
    %v163 = vmul.f32 %v161, %v157
    %v164 = vadd.f32 %v162, 1.4214138
    %v165 = vadd.f32 %v163, 1.4214138
    %v166 = vmul.f32 %v164, %v155
    %v167 = vmul.f32 %v165, %v157
    %v168 = vadd.f32 %v166, -0.28449672
    %v169 = vadd.f32 %v167, -0.28449672
    %v170 = vmul.f32 %v168, %v155
    %v171 = vmul.f32 %v169, %v157
    %v172 = vadd.f32 %v170, 0.2548296
    %v173 = vadd.f32 %v171, 0.2548296
    %v174 = vmul.f32 %v172, %v155
    %v175 = vmul.f32 %v173, %v157
    %v176 = vsub.f32 0.0, %v148
    %v177 = vsub.f32 0.0, %v149
    %v178 = vmul.f32 %v176, %v148
    %v179 = vmul.f32 %v177, %v149
    %v180 = vmul.f32 %v178, 1.442695
    %v181 = vpow.pop %v180
    %v182 = vmul.f32 %v179, 1.442695
    %v183 = vpow.pop %v182
    %v184 = vmul.f32 %v174, %v181
    %v185 = vmul.f32 %v175, %v183
    %v186 = vsub.f32 1.0, %v184
    %v187 = vsub.f32 1.0, %v185
    %vm188 = vcmp.ge.f32.partialorder %v146, 0.0
    %vm189 = vcmp.ge.f32.partialorder %v147, 0.0
    %v190 = vsub.f32 0.0, %v186
    %v191 = vsub.f32 0.0, %v187
    %v192 = vsel %vm188, %v186, %v190
    %v193 = vsel %vm189, %v187, %v191
    %v194 = vadd.f32 %v192, 1.0
    %v195 = vadd.f32 %v193, 1.0
    %v196 = vmul.f32 %v144, %v194
    %v197 = vmul.f32 %v145, %v195
    %v198 = vsel %vm62, %v196, 0.0
    %199 = vadd.xlane.f32.xlu0 %v198
    %v200 = vpop.xlane.xlu0 %199
    %v201 = vsel %vm62, %v197, 0.0
    %202 = vadd.xlane.f32.xlu0 %v201
    %v203 = vpop.xlane.xlu0 %202
    %v204 = vmul.f32 %v196, %v196
    %v205 = vmul.f32 %v197, %v197
    %v206 = vsel %vm62, %v204, 0.0
    %207 = vadd.xlane.f32.xlu0 %v206
    %v208 = vpop.xlane.xlu0 %207
    %v209 = vsel %vm62, %v205, 0.0
    %210 = vadd.xlane.f32.xlu0 %v209
    %v211 = vpop.xlane.xlu0 %210
    %v212 = vmul.f32 %v200, 0.03125
    %v213 = vmul.f32 %v203, 0.03125
    %v214 = vmul.f32 %v208, 0.03125
    %v215 = vmul.f32 %v211, 0.03125
    %v216 = vmul.f32 %v212, %v212
    %v217 = vmul.f32 %v213, %v213
    %v218 = vsub.f32 %v214, %v216
    %v219 = vsub.f32 %v215, %v217
    %v220 = vmax.f32 %v218, 0.0
    %v221 = vmax.f32 %v219, 0.0
    %v222 = vadd.f32 %v220, 1e-12
    %v223 = vadd.f32 %v221, 1e-12
    %v224 = vrsqrt.pop %v222
    %v225 = vrsqrt.pop %v223
    %v226 = vsub.f32 %v196, %v212
    %v227 = vsub.f32 %v197, %v213
    %v228 = vmul.f32 %v226, %v224
    %v229 = vmul.f32 %v227, %v225
    %v230 = vld [vmem:[%s3] sm:$0x1]
    %v232 = vlaneseq
    %v233 = vshrl.u32 %v232, 7
    %v234 = vsub.s32 0, %v233
    %v235 = vrot.slane %v230, %v234
    %v237 = vmul.f32 %v228, %v235
    %v238 = vmul.f32 %v229, %v235
    %v239 = vld [vmem:[%s4] sm:$0x1]
    %v241 = vlaneseq
    %v242 = vshrl.u32 %v241, 7
    %v243 = vsub.s32 0, %v242
    %v244 = vrot.slane %v239, %v243
    %v246 = vadd.f32 %v237, %v244
    %v247 = vadd.f32 %v238, %v244
    %248 = vst.msk [vmem:[#allocation7] sm:$0xff] %vm62, %v246
    %249 = vst.msk [vmem:[#allocation7 + $0x8] sm:$0xff] %vm62, %v247
    // Predicated region
    $region30: #{tpu_custom_call.1} parent=1 // pred_check
      _
    $region31: #{tpu_custom_call.1} parent=1 // pred_check_branch
      %251 = sbr.rel (0) target = $region33
    $region32: #{tpu_custom_call.1} parent=1 // pred_region
      %s253 = ssub.s32 256, 256
      %254 = vsyncadd [#allocation4], %s253
      %s255 = sshll.u32 [#allocation7], 4
      %s256 = int_to_ptr.vmem [resolvable:$true] %s255
      %261 = dma.vmem_to_hbm [thread:$0]  %s256, 256, %s5, [#allocation4], 128, 128, 8
    $region33: #{tpu_custom_call.1} parent=1 // pred_fallthru
      _
    // Predicated region
    $region34: #{tpu_custom_call.1} parent=1 // pred_check
      _
    $region35: #{tpu_custom_call.1} parent=1 // pred_check_branch
      %263 = sbr.rel (0) target = $region37
    $region36: #{tpu_custom_call.1} parent=1 // pred_region
      %264 = dma.done [#allocation4], 256
    $region37: #{tpu_custom_call.1} parent=1 // pred_fallthru
      _
    %265 = vsyncpa [#allocation3], 1
    %266 = vsyncpa [#allocation6], 1
    %267 = vsyncpa [#allocation4], 1

// kernel: tpu_custom_call.1
$region0: #{tpu_custom_call.1}
  #allocation0 [shape = 'u32[]', space=smem, size = 0x4, offset = 0x4, fixed_abs, tag = 'smem constant byte address 0x4 - core index']
  #allocation1 [shape = 'u32[144,128]{1,0:T(1,128)}', space=vmem, size = 0x12000, scoped, tag = 'internal scratch']
  %s0 = inlined_call_operand.hbm [shape: f32[16,32], index: 0, kind: input, shape index: {}]
  %s1 = inlined_call_operand.hbm [shape: f32[32,32], index: 1, kind: input, shape index: {}]
  %s2 = inlined_call_operand.vmem [shape: f32[1,32], index: 2, kind: input, shape index: {}]
  %s3 = inlined_call_operand.vmem [shape: f32[1,32], index: 3, kind: input, shape index: {}]
  %s4 = inlined_call_operand.vmem [shape: f32[1,32], index: 4, kind: input, shape index: {}]
  %s5 = inlined_call_operand.hbm [shape: f32[16,32], index: 5, kind: output, shape index: {}]
  %s6 = sld [smem:[#allocation0]]
  $region38: #{tpu_custom_call.1} parent=0
    _
  %s8 = ssub.s32 1, %s6
  %s9 = scalar_select 0, %s8, %s6
  $region1: #{tpu_custom_call.1} parent=0
    #allocation2 [shape = 'u8[8192]{0}', space=vmem, size = 0x2000, scoped, tag = 'input window, operand 0, single buffered']
    #allocation3 [shape = 's32[1]{0}', space=sflag, size = 0x4, scoped, tag = 'scoped memory for tpu_custom_call.1']
    #allocation4 [shape = 's32[1]{0}', space=sflag, size = 0x4, scoped, tag = 'scoped memory for tpu_custom_call.1']
    #allocation5 [shape = 'u8[16384]{0}', space=vmem, size = 0x4000, scoped, tag = 'input window, operand 1, single buffered']
    #allocation6 [shape = 's32[1]{0}', space=sflag, size = 0x4, scoped, tag = 'scoped memory for tpu_custom_call.1']
    #allocation7 [shape = 'u8[8192]{0}', space=vmem, size = 0x2000, scoped, tag = 'output window, operand 0, single buffered']
    %10 = vsyncpa [#allocation3], 0
    %11 = vsyncpa [#allocation6], 0
    %12 = vsyncpa [#allocation4], 0
    // Predicated region
    $region2: #{tpu_custom_call.1} parent=1 // pred_check
      _
    $region3: #{tpu_custom_call.1} parent=1 // pred_check_branch
      %14 = sbr.rel (0) target = $region5
    $region4: #{tpu_custom_call.1} parent=1 // pred_region
      %s16 = ssub.s32 256, 256
      %17 = vsyncadd [#allocation3], %s16
      %s18 = sshll.u32 [#allocation2], 4
      %s19 = int_to_ptr.vmem [resolvable:$true] %s18
      %24 = dma.hbm_to_vmem [thread:$0]  %s0, 256, %s19, [#allocation3], 128, 128, 8
    $region5: #{tpu_custom_call.1} parent=1 // pred_fallthru
      _
    // Predicated region
    $region6: #{tpu_custom_call.1} parent=1 // pred_check
      _
    $region7: #{tpu_custom_call.1} parent=1 // pred_check_branch
      %26 = sbr.rel (0) target = $region9
    $region8: #{tpu_custom_call.1} parent=1 // pred_region
      %s28 = ssub.s32 512, 512
      %29 = vsyncadd [#allocation6], %s28
      %s30 = sshll.u32 [#allocation5], 4
      %s31 = int_to_ptr.vmem [resolvable:$true] %s30
      %36 = dma.hbm_to_vmem [thread:$0]  %s1, 512, %s31, [#allocation6], 128, 128, 8
    $region9: #{tpu_custom_call.1} parent=1 // pred_fallthru
      _
    // Predicated region
    $region10: #{tpu_custom_call.1} parent=1 // pred_check
      _
    $region11: #{tpu_custom_call.1} parent=1 // pred_check_branch
      %38 = sbr.rel (0) target = $region13
    $region12: #{tpu_custom_call.1} parent=1 // pred_region
      _
    $region13: #{tpu_custom_call.1} parent=1 // pred_fallthru
      _
    // Predicated region
    $region14: #{tpu_custom_call.1} parent=1 // pred_check
      _
    $region15: #{tpu_custom_call.1} parent=1 // pred_check_branch
      %40 = sbr.rel (0) target = $region17
    $region16: #{tpu_custom_call.1} parent=1 // pred_region
      _
    $region17: #{tpu_custom_call.1} parent=1 // pred_fallthru
      _
    // Predicated region
    $region18: #{tpu_custom_call.1} parent=1 // pred_check
      _
    $region19: #{tpu_custom_call.1} parent=1 // pred_check_branch
      %42 = sbr.rel (0) target = $region21
    $region20: #{tpu_custom_call.1} parent=1 // pred_region
      _
    $region21: #{tpu_custom_call.1} parent=1 // pred_fallthru
      _
    // Predicated region
    $region22: #{tpu_custom_call.1} parent=1 // pred_check
      _
    $region23: #{tpu_custom_call.1} parent=1 // pred_check_branch
      %44 = sbr.rel (0) target = $region25
    $region24: #{tpu_custom_call.1} parent=1 // pred_region
      %45 = dma.done [#allocation3], 256
    $region25: #{tpu_custom_call.1} parent=1 // pred_fallthru
      _
    // Predicated region
    $region26: #{tpu_custom_call.1} parent=1 // pred_check
      _
    $region27: #{tpu_custom_call.1} parent=1 // pred_check_branch
      %47 = sbr.rel (0) target = $region29
    $region28: #{tpu_custom_call.1} parent=1 // pred_region
      %48 = dma.done [#allocation6], 512
    $region29: #{tpu_custom_call.1} parent=1 // pred_fallthru
      _
    %v49 = vld [vmem:[#allocation2] sm:$0xff]
    %v50 = vld [vmem:[#allocation2 + $0x8] sm:$0xff]
    %v51 = vld [vmem:[#allocation5] sm:$0xff]
    %v52 = vld [vmem:[#allocation5 + $0x8] sm:$0xff]
    %v53 = vld [vmem:[#allocation5 + $0x10] sm:$0xff]
    %v54 = vld [vmem:[#allocation5 + $0x18] sm:$0xff]
    %v55 = vld [vmem:[%s2] sm:$0x1]
    %v57 = vlaneseq
    %v58 = vshrl.u32 %v57, 7
    %v59 = vsub.s32 0, %v58
    %v60 = vrot.slane %v55, %v59
    %vm62 = vcmask 261120
    %v64 = vsel %vm62, %v49, 0
    %v67 = vsel %vm62, %v50, 0
    %69 = vmatprep.subr.mxu0 0.0
    %70 = vmatpush1.msra.mxu0 0.0
    %71 = vmatprep.subr.mxu0 0.0
    %72 = vmatpush1.msra.mxu0 0.0
    %73 = vmatprep.subr.mxu0 0.0
    %74 = vmatpush1.msra.mxu0 0.0
    %75 = vmatprep.subr.mxu0 0.0
    %76 = vmatpush1.msra.mxu0 0.0
    %77 = vmatprep.subr.mxu0 0.0
    %78 = vmatpush1.msra.mxu0 0.0
    %79 = vmatprep.subr.mxu0 0.0
    %80 = vmatpush1.msra.mxu0 0.0
    %81 = vmatprep.subr.mxu0 0.0
    %82 = vmatpush1.msra.mxu0 0.0
    %83 = vmatprep.subr.mxu0 0.0
    %84 = vmatpush1.msra.mxu0 0.0
    %85 = vmatprep.subr.mxu0 0.0
    %86 = vmatpush1.msra.mxu0 0.0
    %87 = vmatprep.subr.mxu0 0.0
    %88 = vmatpush1.msra.mxu0 0.0
    %89 = vmatprep.subr.mxu0 0.0
    %90 = vmatpush1.msra.mxu0 0.0
    %91 = vmatprep.subr.mxu0 0.0
    %92 = vmatpush1.msra.mxu0 0.0
    %93 = vmatprep.subr.mxu0 0.0
    %94 = vmatpush1.msra.mxu0 %v54
    %95 = vmatprep.subr.mxu0 0.0
    %96 = vmatpush1.msra.mxu0 %v53
    %97 = vmatprep.subr.mxu0 0.0
    %98 = vmatpush1.msra.mxu0 %v52
    %99 = vmatprep.subr.mxu0 0.0
    %100 = vmatpush1.msra.mxu0 %v51
    %101 = vmatprep.subr.mxu0 0.0
    %102 = vmatpush2.msra.mxu0 0.0
    %103 = vmatprep.subr.mxu0 0.0
    %104 = vmatpush2.msra.mxu0 0.0
    %105 = vmatprep.subr.mxu0 0.0
    %106 = vmatpush2.msra.mxu0 0.0
    %107 = vmatprep.subr.mxu0 0.0
    %108 = vmatpush2.msra.mxu0 0.0
    %109 = vmatprep.subr.mxu0 0.0
    %110 = vmatpush2.msra.mxu0 0.0
    %111 = vmatprep.subr.mxu0 0.0
    %112 = vmatpush2.msra.mxu0 0.0
    %113 = vmatprep.subr.mxu0 0.0
    %114 = vmatpush2.msra.mxu0 0.0
    %115 = vmatprep.subr.mxu0 0.0
    %116 = vmatpush2.msra.mxu0 0.0
    %117 = vmatprep.subr.mxu0 0.0
    %118 = vmatpush2.msra.mxu0 0.0
    %119 = vmatprep.subr.mxu0 0.0
    %120 = vmatpush2.msra.mxu0 0.0
    %121 = vmatprep.subr.mxu0 0.0
    %122 = vmatpush2.msra.mxu0 0.0
    %123 = vmatprep.subr.mxu0 0.0
    %124 = vmatpush2.msra.mxu0 0.0
    %125 = vmatprep.subr.mxu0 0.0
    %126 = vmatpush2.msra.mxu0 0.0
    %127 = vmatprep.subr.mxu0 0.0
    %128 = vmatpush2.msra.mxu0 0.0
    %129 = vmatprep.subr.mxu0 0.0
    %130 = vmatpush2.msra.mxu0 0.0
    %131 = vmatprep.subr.mxu0 0.0
    %132 = vmatpush2.msra.mxu0 0.0
    %133 = vmatprep.mubr.f32.mxu0 0.0
    %134 = vmatmul.mubr.f32.gmra.mxu0 %v64
    %v135 = vpop.f32.mrf.mxu0
    %v136 = vadd.f32 %v60, %v135
    %v137 = vpop.f32.mrf.mxu0
    %138 = vmatprep.mubr.f32.mxu0 0.0
    %139 = vmatmul.mubr.f32.gmra.mxu0 %v67
    %v140 = vpop.f32.mrf.mxu0
    %v141 = vadd.f32 %v60, %v140
    %v142 = vpop.f32.mrf.mxu0
    %143 = vdwg.mxu0
    %v144 = vmul.f32 %v136, 0.5
    %v145 = vmul.f32 %v141, 0.5
    %v146 = vmul.f32 %v136, 0.70710677
    %v147 = vmul.f32 %v141, 0.70710677
    %v148 = vand.u32 2147483647, %v146
    %v149 = vand.u32 2147483647, %v147
    %v150 = vmul.f32 %v148, 0.3275911
    %v151 = vmul.f32 %v149, 0.3275911
    %v152 = vadd.f32 %v150, 1.0
    %v153 = vadd.f32 %v151, 1.0
    %v154 = vrcp.pop %v152
    %v155 = vmul.f32 1.0, %v154
    %v156 = vrcp.pop %v153
    %v157 = vmul.f32 1.0, %v156
    %v158 = vmul.f32 %v155, 1.0614054
    %v159 = vmul.f32 %v157, 1.0614054
    %v160 = vadd.f32 %v158, -1.4531521
    %v161 = vadd.f32 %v159, -1.4531521
    %v162 = vmul.f32 %v160, %v155
    %v163 = vmul.f32 %v161, %v157
    %v164 = vadd.f32 %v162, 1.4214138
    %v165 = vadd.f32 %v163, 1.4214138
    %v166 = vmul.f32 %v164, %v155
    %v167 = vmul.f32 %v165, %v157
    %v168 = vadd.f32 %v166, -0.28449672
    %v169 = vadd.f32 %v167, -0.28449672
    %v170 = vmul.f32 %v168, %v155
    %v171 = vmul.f32 %v169, %v157
    %v172 = vadd.f32 %v170, 0.2548296
    %v173 = vadd.f32 %v171, 0.2548296
    %v174 = vmul.f32 %v172, %v155
    %v175 = vmul.f32 %v173, %v157
    %v176 = vsub.f32 0.0, %v148
    %v177 = vsub.f32 0.0, %v149
    %v178 = vmul.f32 %v176, %v148
    %v179 = vmul.f32 %v177, %v149
    %v180 = vmul.f32 %v178, 1.442695
    %v181 = vpow.pop %v180
    %v182 = vmul.f32 %v179, 1.442695
    %v183 = vpow.pop %v182
    %v184 = vmul.f32 %v174, %v181
    %v185 = vmul.f32 %v175, %v183
    %v186 = vsub.f32 1.0, %v184
    %v187 = vsub.f32 1.0, %v185
    %vm188 = vcmp.ge.f32.partialorder %v146, 0.0
    %vm189 = vcmp.ge.f32.partialorder %v147, 0.0
    %v190 = vsub.f32 0.0, %v186
    %v191 = vsub.f32 0.0, %v187
    %v192 = vsel %vm188, %v186, %v190
    %v193 = vsel %vm189, %v187, %v191
    %v194 = vadd.f32 %v192, 1.0
    %v195 = vadd.f32 %v193, 1.0
    %v196 = vmul.f32 %v144, %v194
    %v197 = vmul.f32 %v145, %v195
    %v198 = vsel %vm62, %v196, 0.0
    %199 = vadd.xlane.f32.xlu0 %v198
    %v200 = vpop.xlane.xlu0 %199
    %v201 = vsel %vm62, %v197, 0.0
    %202 = vadd.xlane.f32.xlu0 %v201
    %v203 = vpop.xlane.xlu0 %202
    %v204 = vmul.f32 %v196, %v196
    %v205 = vmul.f32 %v197, %v197
    %v206 = vsel %vm62, %v204, 0.0
    %207 = vadd.xlane.f32.xlu0 %v206
    %v208 = vpop.xlane.xlu0 %207
    %v209 = vsel %vm62, %v205, 0.0
    %210 = vadd.xlane.f32.xlu0 %v209
    %v211 = vpop.xlane.xlu0 %210
    %v212 = vmul.f32 %v200, 0.03125
    %v213 = vmul.f32 %v203, 0.03125
    %v214 = vmul.f32 %v208, 0.03125
    %v215 = vmul.f32 %v211, 0.03125
    %v216 = vmul.f32 %v212, %v212
    %v217 = vmul.f32 %v213, %v213
    %v218 = vsub.f32 %v214, %v216
    %v219 = vsub.f32 %v215, %v217
    %v220 = vmax.f32 %v218, 0.0
    %v221 = vmax.f32 %v219, 0.0
    %v222 = vadd.f32 %v220, 1e-12
    %v223 = vadd.f32 %v221, 1e-12
    %v224 = vrsqrt.pop %v222
    %v225 = vrsqrt.pop %v223
    %v226 = vsub.f32 %v196, %v212
    %v227 = vsub.f32 %v197, %v213
    %v228 = vmul.f32 %v226, %v224
    %v229 = vmul.f32 %v227, %v225
    %v230 = vld [vmem:[%s3] sm:$0x1]
    %v232 = vlaneseq
    %v233 = vshrl.u32 %v232, 7
    %v234 = vsub.s32 0, %v233
    %v235 = vrot.slane %v230, %v234
    %v237 = vmul.f32 %v228, %v235
    %v238 = vmul.f32 %v229, %v235
    %v239 = vld [vmem:[%s4] sm:$0x1]
    %v241 = vlaneseq
    %v242 = vshrl.u32 %v241, 7
    %v243 = vsub.s32 0, %v242
    %v244 = vrot.slane %v239, %v243
    %v246 = vadd.f32 %v237, %v244
    %v247 = vadd.f32 %v238, %v244
    %248 = vst.msk [vmem:[#allocation7] sm:$0xff] %vm62, %v246
    %249 = vst.msk [vmem:[#allocation7 + $0x8] sm:$0xff] %vm62, %v247
    // Predicated region
    $region30: #{tpu_custom_call.1} parent=1 // pred_check
      _
    $region31: #{tpu_custom_call.1} parent=1 // pred_check_branch
      %251 = sbr.rel (0) target = $region33
    $region32: #{tpu_custom_call.1} parent=1 // pred_region
      %s253 = ssub.s32 256, 256
      %254 = vsyncadd [#allocation4], %s253
      %s255 = sshll.u32 [#allocation7], 4
      %s256 = int_to_ptr.vmem [resolvable:$true] %s255
      %261 = dma.vmem_to_hbm [thread:$0]  %s256, 256, %s5, [#allocation4], 128, 128, 8
    $region33: #{tpu_custom_call.1} parent=1 // pred_fallthru
      _
    // Predicated region
    $region34: #{tpu_custom_call.1} parent=1 // pred_check
      _
    $region35: #{tpu_custom_call.1} parent=1 // pred_check_branch
      %263 = sbr.rel (0) target = $region37
    $region36: #{tpu_custom_call.1} parent=1 // pred_region
      %264 = dma.done [#allocation4], 256
    $region37: #{tpu_custom_call.1} parent=1 // pred_fallthru
      _
    %265 = vsyncpa [#allocation3], 1
    %266 = vsyncpa [#allocation6], 1
    %267 = vsyncpa [#allocation4], 1

</llo_original>
